<compile_context>
chip_gen: v7x
topology: tpu7x:2x2x1
jax: 0.10.0
libtpu: 0.0.40
codegen_flags: <defaults>
</compile_context>

<pallas_src>
import functools

import jax
import jax.numpy as jnp
from jax.experimental import pallas as pl
from jax.experimental.pallas import tpu as pltpu


def _round_up(a, m):
    return (a + m - 1) // m * m


def _choose_tiles(B, L, D, itemsize):
    """Pick (TB, TL, TD). x block sized in its own dtype, f32 temporaries capped."""
    TB = 8
    # Budget: 6 MiB of x-dtype data per block, but never more than 2M elements
    # (keeps the f32 cast/product temporaries of one block at <= 8 MiB).
    cap_elems = min((6 * 1024 * 1024) // itemsize, 2 * 1024 * 1024)

    # Feature tile: lane-dense multiple of 128, full-D when the budget allows
    # while still leaving room for TL >= 128.
    td_max = max(128, (cap_elems // (TB * 128)) // 128 * 128)
    TD = min(_round_up(D, 128), td_max)

    # v7x has 2 TensorCores: if the batch axis yields only one parallel block,
    # split D so the second core gets work (negligible cost on v5e/v6e).
    if pl.cdiv(B, TB) == 1 and pl.cdiv(D, TD) == 1 and D > 128:
        TD = _round_up(pl.cdiv(D, 2), 128)

    tl_cap = max(128, (cap_elems // (TB * TD)) // 128 * 128)
    if L <= tl_cap:
        TL = L                      # single L step, no tail mask compiled
    else:
        n = pl.cdiv(L, tl_cap)      # balanced chunks -> per-tile slack < 128 rows
        TL = _round_up(pl.cdiv(L, n), 128)
    return TB, TL, TD


def _mean_kernel(x_ref, o_ref, acc_ref, *, inv_len, seq_len, tl):
    li = pl.program_id(2)

    @pl.when(li == 0)
    def _():
        acc_ref[...] = jnp.zeros_like(acc_ref)

    x = x_ref[...].astype(jnp.float32)                      # (TB, TL, TD)
    if seq_len % tl != 0:
        # Zero out-of-range L rows (garbage reads past the true sequence end).
        pos = li * tl + jax.lax.broadcasted_iota(jnp.int32, x.shape, 1)
        x = jnp.where(pos < seq_len, x, 0.0)
    acc_ref[...] += jnp.sum(x, axis=1)

    @pl.when(li == pl.num_programs(2) - 1)
    def _():
        o_ref[...] = (acc_ref[...] * inv_len).astype(o_ref.dtype)


def _masked_kernel(x_ref, m_ref, inv_ref, o_ref, acc_ref, *, seq_len, tl):
    li = pl.program_id(2)

    @pl.when(li == 0)
    def _():
        acc_ref[...] = jnp.zeros_like(acc_ref)

    x = x_ref[...].astype(jnp.float32)                      # (TB, TL, TD)
    m = m_ref[...]                                          # (TB, TL) f32
    prod = x * m[:, :, None]
    if seq_len % tl != 0:
        # Mask the product (not just m): garbage x rows may be NaN/Inf and
        # NaN * 0 would otherwise poison valid output rows.
        pos = li * tl + jax.lax.broadcasted_iota(jnp.int32, prod.shape, 1)
        prod = jnp.where(pos < seq_len, prod, 0.0)
    acc_ref[...] += jnp.sum(prod, axis=1)

    @pl.when(li == pl.num_programs(2) - 1)
    def _():
        # Fused divide: inv_ref holds 1 / count_nonzero(mask, dim=1) per row.
        o_ref[...] = (acc_ref[...] * inv_ref[...]).astype(o_ref.dtype)


def global_avg_pool1d(x, mask=None, dim=1, keepdim=False):
    """Pallas implementation of GlobalAvgPool1d.forward for 3-D inputs pooled over dim=1."""
    # TODO(synk): only the module's default dim=1 on (B, L, D) inputs is implemented.
    assert x.ndim == 3 and dim == 1, "kernel implements dim=1 on (B, L, D) inputs"
    B, L, D = x.shape
    itemsize = jnp.dtype(x.dtype).itemsize
    TB, TL, TD = _choose_tiles(B, L, D, itemsize)
    grid = (pl.cdiv(B, TB), pl.cdiv(D, TD), pl.cdiv(L, TL))

    x_spec = pl.BlockSpec((TB, TL, TD), lambda b, d, l: (b, l, d))
    out_spec = pl.BlockSpec((TB, TD), lambda b, d, l: (b, d))
    scratch = [pltpu.VMEM((TB, TD), jnp.float32)]

    # VMEM limit from actual buffer sizes (double-buffered I/O + in-kernel f32
    # temporaries + margin), clamped to stay inside v7x's 64 MiB physical VMEM.
    block_elems = TB * TL * TD
    vmem_est = (
        2 * block_elems * itemsize       # x double buffer
        + 3 * block_elems * 4            # f32 cast / product / select temporaries
        + 2 * TB * TL * 4                # mask double buffer
        + 2 * TB * 4                     # inv-count double buffer
        + 2 * TB * TD * itemsize         # output double buffer
        + TB * TD * 4                    # accumulator scratch
        + (2 << 20)                      # compiler-internal scratch margin
    )
    cparams = pltpu.CompilerParams(
        dimension_semantics=("parallel", "parallel", "arbitrary"),
        vmem_limit_bytes=int(min(max(vmem_est, 16 << 20), 56 << 20)),
    )

    if mask is None:
        out = pl.pallas_call(
            functools.partial(_mean_kernel, inv_len=1.0 / L, seq_len=L, tl=TL),
            out_shape=jax.ShapeDtypeStruct((B, D), x.dtype),
            grid_spec=pltpu.PrefetchScalarGridSpec(
                num_scalar_prefetch=0,
                grid=grid,
                in_specs=[x_spec],
                out_specs=out_spec,
                scratch_shapes=scratch,
            ),
            compiler_params=cparams,
        )(x)
    else:
        if mask.ndim == 3 and mask.shape[-1] == 1:
            mask2d = mask[:, :, 0]
        else:
            mask2d = mask
        assert mask2d.shape == (B, L), "mask expected as (B, L) or (B, L, 1)"
        # TODO(synk): masks with a non-degenerate feature axis (B, L, D) are not supported.

        # Keep the mask in f32 (exact even for fractional weight masks).
        m_f32 = mask2d.astype(jnp.float32)
        # count_nonzero(mask, dim=1) reciprocal, computed once and fused into the
        # kernel's final step. No zero-guard, matching the PyTorch formula
        # (all-zero mask rows -> inf/nan).
        cnt = jnp.sum((mask2d != 0).astype(jnp.float32), axis=1)
        inv_cnt = (1.0 / cnt)[:, None]                  # (B, 1) f32

        m_spec = pl.BlockSpec((TB, TL), lambda b, d, l: (b, l))
        inv_spec = pl.BlockSpec((TB, 1), lambda b, d, l: (b, 0))

        out = pl.pallas_call(
            functools.partial(_masked_kernel, seq_len=L, tl=TL),
            out_shape=jax.ShapeDtypeStruct((B, D), x.dtype),
            grid_spec=pltpu.PrefetchScalarGridSpec(
                num_scalar_prefetch=0,
                grid=grid,
                in_specs=[x_spec, m_spec, inv_spec],
                out_specs=out_spec,
                scratch_shapes=scratch,
            ),
            compiler_params=cparams,
        )(x, m_f32, inv_cnt)

    if keepdim:
        out = out[:, None, :]  # (B, D) -> (B, 1, D)
    return out


if __name__ == "__main__":
    key = jax.random.PRNGKey(0)
    kx, km, kx2, km2, kx3, km3 = jax.random.split(key, 6)

    # Small shapes consistent with the module (batch=2, seq=8, hidden=32).
    B, L, D = 2, 8, 32
    x = jax.random.normal(kx, (B, L, D), dtype=jnp.float32)
    mask = (jax.random.uniform(km, (B, L, 1)) > 0.3).astype(jnp.float32)

    # Unmasked: x.mean(dim=1, keepdim=False)
    y = global_avg_pool1d(x)
    jax.block_until_ready(y)
    assert y.shape == (B, D)
    assert jnp.allclose(y, jnp.mean(x, axis=1), atol=1e-5, rtol=1e-5)

    # Masked: (x*mask).sum(dim=1) / mask.count_nonzero(dim=1)
    ym = global_avg_pool1d(x, mask=mask)
    jax.block_until_ready(ym)
    ym_ref = jnp.sum(x * mask, axis=1) / jnp.sum((mask != 0).astype(jnp.float32), axis=1)
    assert ym.shape == (B, D)
    assert jnp.allclose(ym, ym_ref, atol=1e-5, rtol=1e-5)

    # keepdim=True variant
    yk = global_avg_pool1d(x, keepdim=True)
    jax.block_until_ready(yk)
    assert yk.shape == (B, 1, D)

    # Larger shapes: unpadded B/D overhang blocks + D split into two parallel tiles.
    B2, L2, D2 = 3, 600, 130
    x2 = jax.random.normal(kx2, (B2, L2, D2), dtype=jnp.float32)
    mask2 = (jax.random.uniform(km2, (B2, L2, 1)) > 0.3).astype(jnp.float32)

    y2 = global_avg_pool1d(x2)
    jax.block_until_ready(y2)
    assert jnp.allclose(y2, jnp.mean(x2, axis=1), atol=1e-4, rtol=1e-4)

    ym2 = global_avg_pool1d(x2, mask=mask2)
    jax.block_until_ready(ym2)
    ym2_ref = jnp.sum(x2 * mask2, axis=1) / jnp.sum((mask2 != 0).astype(jnp.float32), axis=1)
    assert jnp.allclose(ym2, ym2_ref, atol=1e-4, rtol=1e-4)

    # Long sequence: multi-step L reduction exercising the in-kernel L-tail mask.
    B3, L3, D3 = 2, 2000, 130
    x3 = jax.random.normal(kx3, (B3, L3, D3), dtype=jnp.float32)
    mask3 = (jax.random.uniform(km3, (B3, L3, 1)) > 0.3).astype(jnp.float32)

    y3 = global_avg_pool1d(x3)
    jax.block_until_ready(y3)
    assert jnp.allclose(y3, jnp.mean(x3, axis=1), atol=2e-4, rtol=1e-3)

    ym3 = global_avg_pool1d(x3, mask=mask3)
    jax.block_until_ready(ym3)
    ym3_ref = jnp.sum(x3 * mask3, axis=1) / jnp.sum((mask3 != 0).astype(jnp.float32), axis=1)
    assert jnp.allclose(ym3, ym3_ref, atol=2e-4, rtol=1e-3)

    print("KERNEL_OK")
</pallas_src>

<mosaic_0001>
module attributes {stable_mosaic.version = 11 : i64} {
  func.func @_mean_kernel(%arg0: i32, %arg1: i32, %arg2: i32, %arg3: memref<8x8x128xf32, #tpu.memory_space<vmem>>, %arg4: memref<8x128xf32, #tpu.memory_space<vmem>>, %arg5: memref<8x128xf32, #tpu.memory_space<vmem>>) attributes {dimension_semantics = [#tpu.dimension_semantics<parallel>, #tpu.dimension_semantics<parallel>, #tpu.dimension_semantics<arbitrary>], iteration_bounds = array<i64: 1, 1, 1>, scalar_prefetch = 0 : i64, scratch_operands = 1 : i64, tpu.core_type = #tpu.core_type<tc>, window_params = [{transform_indices = @transform_0, window_bounds = array<i64: 8, 8, 128>}, {transform_indices = @transform_1, window_bounds = array<i64: 8, 128>}]} {
    %c0_i32 = arith.constant 0 : i32
    %0 = arith.cmpi eq, %arg2, %c0_i32 : i32
    %1 = arith.extui %0 : i1 to i32
    %c0_i32_0 = arith.constant 0 : i32
    %2 = arith.cmpi ne, %1, %c0_i32_0 : i32
    scf.if %2 {
      %cst_9 = arith.constant 0.000000e+00 : f32
      %11 = vector.broadcast %cst_9 : f32 to vector<8x128xf32>
      %c0_10 = arith.constant 0 : index
      %c0_11 = arith.constant 0 : index
      %12 = vector.load %arg5[%c0_10, %c0_11] : memref<8x128xf32, #tpu.memory_space<vmem>>, vector<8x128xf32>
      tpu.vector_store %arg5[%c0_10, %c0_11], %11 {strides = array<i32>} : memref<8x128xf32, #tpu.memory_space<vmem>>, vector<8x128xf32>,
    } else {
    }
    %c0 = arith.constant 0 : index
    %c0_1 = arith.constant 0 : index
    %c0_2 = arith.constant 0 : index
    %3 = vector.load %arg3[%c0, %c0_1, %c0_2] : memref<8x8x128xf32, #tpu.memory_space<vmem>>, vector<8x8x128xf32>
    %c0_3 = arith.constant 0 : index
    %c0_4 = arith.constant 0 : index
    %4 = vector.load %arg5[%c0_3, %c0_4] : memref<8x128xf32, #tpu.memory_space<vmem>>, vector<8x128xf32>
    %cst = arith.constant dense<0.000000e+00> : vector<8x128xf32>
    %5 = vector.multi_reduction <add>, %3, %cst [1] : vector<8x8x128xf32> to vector<8x128xf32>
    %6 = arith.addf %4, %5 : vector<8x128xf32>
    %c0_5 = arith.constant 0 : index
    %c0_6 = arith.constant 0 : index
    %7 = vector.load %arg5[%c0_5, %c0_6] : memref<8x128xf32, #tpu.memory_space<vmem>>, vector<8x128xf32>
    tpu.vector_store %arg5[%c0_5, %c0_6], %6 {strides = array<i32>} : memref<8x128xf32, #tpu.memory_space<vmem>>, vector<8x128xf32>,
    %c0_i32_7 = arith.constant 0 : i32
    %8 = arith.cmpi eq, %arg2, %c0_i32_7 : i32
    %9 = arith.extui %8 : i1 to i32
    %c0_i32_8 = arith.constant 0 : i32
    %10 = arith.cmpi ne, %9, %c0_i32_8 : i32
    scf.if %10 {
      %c0_9 = arith.constant 0 : index
      %c0_10 = arith.constant 0 : index
      %11 = vector.load %arg5[%c0_9, %c0_10] : memref<8x128xf32, #tpu.memory_space<vmem>>, vector<8x128xf32>
      %cst_11 = arith.constant 1.250000e-01 : f32
      %12 = vector.broadcast %cst_11 : f32 to vector<8x128xf32>
      %13 = arith.mulf %11, %12 : vector<8x128xf32>
      %c0_12 = arith.constant 0 : index
      %c0_13 = arith.constant 0 : index
      %14 = vector.load %arg4[%c0_12, %c0_13] : memref<8x128xf32, #tpu.memory_space<vmem>>, vector<8x128xf32>
      tpu.vector_store %arg4[%c0_12, %c0_13], %13 {strides = array<i32>} : memref<8x128xf32, #tpu.memory_space<vmem>>, vector<8x128xf32>,
    } else {
    }
    return
  }
  func.func @transform_0(%arg0: i32, %arg1: i32, %arg2: i32) -> (i32, i32, i32) {
    %c0_i32 = arith.constant 0 : i32
    return %arg0, %arg2, %arg1 : i32, i32, i32
  }
  func.func @transform_1(%arg0: i32, %arg1: i32, %arg2: i32) -> (i32, i32) {
    %c0_i32 = arith.constant 0 : i32
    return %arg0, %arg1 : i32, i32
  }
}

</mosaic_0001>

<llo_original>
// kernel: tpu_custom_call.1
$region0: #{tpu_custom_call.1}
  #allocation0 [shape = 'u32[]', space=smem, size = 0x4, offset = 0x4, fixed_abs, tag = 'smem constant byte address 0x4 - core index']
  #allocation1 [shape = 'u32[144,128]{1,0:T(1,128)}', space=vmem, size = 0x12000, scoped, tag = 'internal scratch']
  #allocation2 [shape = 'f32[8,128]{1,0:T(8,128)}', space=vmem, size = 0x1000, scoped, tag = 'scratch operand']
  %s0 = inlined_call_operand.hbm [shape: f32[2,8,32], index: 0, kind: input, shape index: {}]
  %s1 = inlined_call_operand.hbm [shape: f32[2,32], index: 1, kind: output, shape index: {}]
  %s2 = sld [smem:[#allocation0]]
  $region26: #{tpu_custom_call.1} parent=0
    _
  %s4 = ssub.s32 1, %s2
  %s5 = scalar_select 0, %s4, %s2
  $region1: #{tpu_custom_call.1} parent=0
    #allocation3 [shape = 'u8[32768]{0}', space=vmem, size = 0x8000, scoped, tag = 'input window, operand 0, single buffered']
    #allocation4 [shape = 's32[1]{0}', space=sflag, size = 0x4, scoped, tag = 'scoped memory for tpu_custom_call.1']
    #allocation5 [shape = 's32[1]{0}', space=sflag, size = 0x4, scoped, tag = 'scoped memory for tpu_custom_call.1']
    #allocation6 [shape = 'u8[4096]{0}', space=vmem, size = 0x1000, scoped, tag = 'output window, operand 0, single buffered']
    %6 = vsyncpa [#allocation4], 0
    %7 = vsyncpa [#allocation5], 0
    // Predicated region
    $region2: #{tpu_custom_call.1} parent=1 // pred_check
      _
    $region3: #{tpu_custom_call.1} parent=1 // pred_check_branch
      %9 = sbr.rel (0) target = $region5
    $region4: #{tpu_custom_call.1} parent=1 // pred_region
      %s11 = ssub.s32 1024, 256
      %12 = vsyncadd [#allocation4], %s11
      %s13 = sshll.u32 [#allocation3], 4
      %s14 = int_to_ptr.vmem [resolvable:$true] %s13
      %19 = dma.hbm_to_vmem [thread:$0]  %s0, 256, %s14, [#allocation4], 128, 128, 8
    $region5: #{tpu_custom_call.1} parent=1 // pred_fallthru
      _
    // Predicated region
    $region6: #{tpu_custom_call.1} parent=1 // pred_check
      _
    $region7: #{tpu_custom_call.1} parent=1 // pred_check_branch
      %21 = sbr.rel (0) target = $region9
    $region8: #{tpu_custom_call.1} parent=1 // pred_region
      %22 = dma.done [#allocation4], 1024
    $region9: #{tpu_custom_call.1} parent=1 // pred_fallthru
      _
    %p23 = scmp.eq.s32.totalorder 0, 0
    // Predicated region
    $region10: #{tpu_custom_call.1} parent=1 // pred_check
      %p24 = pneg %p23
    $region11: #{tpu_custom_call.1} parent=1 // pred_check_branch
      %26 = sbr.rel (%p24) target = $region13
    $region12: #{tpu_custom_call.1} parent=1 // pred_region
      %27 = vst [vmem:[#allocation2] sm:$0xff] 0.0
    $region13: #{tpu_custom_call.1} parent=1 // pred_fallthru
      _
    %v28 = vld [vmem:[#allocation3] sm:$0xff]
    %v29 = vld [vmem:[#allocation3 + $0x8] sm:$0xff]
    %v30 = vld [vmem:[#allocation3 + $0x10] sm:$0xff]
    %v31 = vld [vmem:[#allocation3 + $0x18] sm:$0xff]
    %v32 = vld [vmem:[#allocation3 + $0x20] sm:$0xff]
    %v33 = vld [vmem:[#allocation3 + $0x28] sm:$0xff]
    %v34 = vld [vmem:[#allocation3 + $0x30] sm:$0xff]
    %v35 = vld [vmem:[#allocation3 + $0x38] sm:$0xff]
    %v36 = vld [vmem:[#allocation2] sm:$0xff]
    %v37 = vrot.slane %v28, 4
    %v38 = vadd.f32 %v28, %v37
    %v39 = vrot.slane %v38, 2
    %v40 = vadd.f32 %v38, %v39
    %v41 = vrot.slane %v40, 1
    %v42 = vadd.f32 %v40, %v41
    %v43 = vrot.slane %v29, 4
    %v44 = vadd.f32 %v29, %v43
    %v45 = vrot.slane %v44, 2
    %v46 = vadd.f32 %v44, %v45
    %v47 = vrot.slane %v46, 1
    %v48 = vadd.f32 %v46, %v47
    %v49 = vrot.slane %v30, 4
    %v50 = vadd.f32 %v30, %v49
    %v51 = vrot.slane %v50, 2
    %v52 = vadd.f32 %v50, %v51
    %v53 = vrot.slane %v52, 1
    %v54 = vadd.f32 %v52, %v53
    %v55 = vrot.slane %v31, 4
    %v56 = vadd.f32 %v31, %v55
    %v57 = vrot.slane %v56, 2
    %v58 = vadd.f32 %v56, %v57
    %v59 = vrot.slane %v58, 1
    %v60 = vadd.f32 %v58, %v59
    %v61 = vrot.slane %v32, 4
    %v62 = vadd.f32 %v32, %v61
    %v63 = vrot.slane %v62, 2
    %v64 = vadd.f32 %v62, %v63
    %v65 = vrot.slane %v64, 1
    %v66 = vadd.f32 %v64, %v65
    %v67 = vrot.slane %v33, 4
    %v68 = vadd.f32 %v33, %v67
    %v69 = vrot.slane %v68, 2
    %v70 = vadd.f32 %v68, %v69
    %v71 = vrot.slane %v70, 1
    %v72 = vadd.f32 %v70, %v71
    %v73 = vrot.slane %v34, 4
    %v74 = vadd.f32 %v34, %v73
    %v75 = vrot.slane %v74, 2
    %v76 = vadd.f32 %v74, %v75
    %v77 = vrot.slane %v76, 1
    %v78 = vadd.f32 %v76, %v77
    %v79 = vrot.slane %v35, 4
    %v80 = vadd.f32 %v35, %v79
    %v81 = vrot.slane %v80, 2
    %v82 = vadd.f32 %v80, %v81
    %v83 = vrot.slane %v82, 1
    %v84 = vadd.f32 %v82, %v83
    %vm93 = vcmask 1041409
    %v94 = vsel %vm93, %v48, %v42
    %vm95 = vcmask 1042434
    %v96 = vsel %vm95, %v54, %v94
    %vm97 = vcmask 1043459
    %v98 = vsel %vm97, %v60, %v96
    %vm99 = vcmask 1044484
    %v100 = vsel %vm99, %v66, %v98
    %vm101 = vcmask 1045509
    %v102 = vsel %vm101, %v72, %v100
    %vm103 = vcmask 1046534
    %v104 = vsel %vm103, %v78, %v102
    %vm105 = vcmask 1047559
    %v106 = vsel %vm105, %v84, %v104
    %v108 = vadd.f32 %v36, %v106
    %109 = vst [vmem:[#allocation2] sm:$0xff] %v108
    // Predicated region
    $region14: #{tpu_custom_call.1} parent=1 // pred_check
      %p110 = pneg %p23
    $region15: #{tpu_custom_call.1} parent=1 // pred_check_branch
      %112 = sbr.rel (%p110) target = $region17
    $region16: #{tpu_custom_call.1} parent=1 // pred_region
      %v113 = vld [vmem:[#allocation2] sm:$0xff]
      %v114 = vmul.f32 %v113, 0.125
      %115 = vst [vmem:[#allocation6] sm:$0xff] %v114
    $region17: #{tpu_custom_call.1} parent=1 // pred_fallthru
      _
    // Predicated region
    $region18: #{tpu_custom_call.1} parent=1 // pred_check
      _
    $region19: #{tpu_custom_call.1} parent=1 // pred_check_branch
      %117 = sbr.rel (0) target = $region21
    $region20: #{tpu_custom_call.1} parent=1 // pred_region
      %s119 = ssub.s32 128, 32
      %120 = vsyncadd [#allocation5], %s119
      %s121 = sshll.u32 [#allocation6], 4
      %s122 = int_to_ptr.vmem [resolvable:$true] %s121
      %127 = dma.vmem_to_hbm [thread:$0]  %s122, 32, %s1, [#allocation5], 32, 32, 2
    $region21: #{tpu_custom_call.1} parent=1 // pred_fallthru
      _
    // Predicated region
    $region22: #{tpu_custom_call.1} parent=1 // pred_check
      _
    $region23: #{tpu_custom_call.1} parent=1 // pred_check_branch
      %129 = sbr.rel (0) target = $region25
    $region24: #{tpu_custom_call.1} parent=1 // pred_region
      %130 = dma.done [#allocation5], 128
    $region25: #{tpu_custom_call.1} parent=1 // pred_fallthru
      _
    %131 = vsyncpa [#allocation4], 1
    %132 = vsyncpa [#allocation5], 1

</llo_original>
